<compile_context>
chip_gen: v5e
topology: v5e:2x2
jax: 0.10.0
libtpu: 0.0.40
codegen_flags: <defaults>
</compile_context>

<pallas_src>
import jax
import jax.numpy as jnp
from jax.experimental import pallas as pl
from jax.experimental.pallas import tpu as pltpu

HIDDEN = 64


def _round_up(x, m):
    return ((x + m - 1) // m) * m


def _policy_kernel(obs_ref, w1_ref, b1_ref, w2_ref, b2_ref, w3_ref, b3_ref, out_ref):
    cdt = w1_ref.dtype  # MXU operand dtype (f32 or bf16), set once in prepare_*
    adt = b1_ref.dtype  # bias-add / tanh dtype (f32 default; bf16 on v6e/v7x)

    # In-kernel cast of the obs tile (hidden under the obs DMA; no extra HBM pass).
    x = obs_ref[...].astype(cdt)

    # Three dependent MXU matmuls with f32 accumulation.
    h1 = jnp.dot(x, w1_ref[...], preferred_element_type=jnp.float32)
    h1 = jnp.tanh(h1.astype(adt) + b1_ref[...])
    h2 = jnp.dot(h1.astype(cdt), w2_ref[...], preferred_element_type=jnp.float32)
    h2 = jnp.tanh(h2.astype(adt) + b2_ref[...])
    out = jnp.dot(h2.astype(cdt), w3_ref[...], preferred_element_type=jnp.float32)
    out = out + b3_ref[...].astype(jnp.float32)
    out_ref[...] = out.astype(out_ref.dtype)


def prepare_policy_params(params, *, compute_dtype=jnp.float32,
                          activation_dtype=jnp.float32):
    """One-time per-model parameter prep (hoisted out of the forward path).

    compute_dtype: MXU operand dtype for the weights (bf16 halves weight DMA
      bytes on v6e/v7x; accumulation is always f32).
    activation_dtype: dtype of the bias-add/tanh chain (bf16 shortens the
      VPU/EUP critical path on v6e/v7x; keep f32 for v5e / exact parity).
    """
    return {
        "w1": params["w1"].astype(compute_dtype),
        "b1": params["b1"].astype(activation_dtype),
        "w2": params["w2"].astype(compute_dtype),
        "b2": params["b2"].astype(activation_dtype),
        "w3": params["w3"].astype(compute_dtype),
        "b3": params["b3"].astype(jnp.float32),  # final bias-add stays f32
    }


def _tile_batch(B, block_batch):
    """Balanced batch tiles, >= 2 tiles when B allows (v7x megacore)."""
    n_tiles = pl.cdiv(B, block_batch)
    if B >= 16:
        n_tiles = max(n_tiles, 2)
    tb = _round_up(pl.cdiv(B, n_tiles), 8)
    n_tiles = pl.cdiv(B, tb)
    return tb, tb * n_tiles


def policy_forward(obs, prepared_params, *, block_batch=1024):
    """Forward pass of the Policy MLP.

    obs: (B, input_dim) f32 (cast to the MXU operand dtype inside the kernel).
    prepared_params: output of prepare_policy_params().
    """
    w1, b1 = prepared_params["w1"], prepared_params["b1"]
    w2, b2 = prepared_params["w2"], prepared_params["b2"]
    w3, b3 = prepared_params["w3"], prepared_params["b3"]

    B, input_dim = obs.shape
    out_dim = w3.shape[1]

    tb, b_pad = _tile_batch(B, block_batch)
    # Tail pad is at most a few rows with balanced tiles; skip entirely when
    # the tiles divide B exactly.
    obs_p = obs if b_pad == B else jnp.pad(obs, ((0, b_pad - B), (0, 0)))

    grid = (b_pad // tb,)

    flops = 2 * b_pad * (input_dim * HIDDEN + HIDDEN * HIDDEN + HIDDEN * out_dim)
    bytes_accessed = (
        obs.size * obs.dtype.itemsize
        + b_pad * out_dim * 4
        + sum(a.size * a.dtype.itemsize for a in (w1, b1, w2, b2, w3, b3))
    )

    out = pl.pallas_call(
        _policy_kernel,
        out_shape=jax.ShapeDtypeStruct((b_pad, out_dim), jnp.float32),
        grid_spec=pltpu.PrefetchScalarGridSpec(
            num_scalar_prefetch=0,
            grid=grid,
            in_specs=[
                pl.BlockSpec((tb, input_dim), lambda i: (i, 0)),      # obs tile
                pl.BlockSpec((input_dim, HIDDEN), lambda i: (0, 0)),  # w1 (resident)
                pl.BlockSpec((1, HIDDEN), lambda i: (0, 0)),          # b1
                pl.BlockSpec((HIDDEN, HIDDEN), lambda i: (0, 0)),     # w2
                pl.BlockSpec((1, HIDDEN), lambda i: (0, 0)),          # b2
                pl.BlockSpec((HIDDEN, out_dim), lambda i: (0, 0)),    # w3
                pl.BlockSpec((1, out_dim), lambda i: (0, 0)),         # b3
            ],
            out_specs=pl.BlockSpec((tb, out_dim), lambda i: (i, 0)),
        ),
        compiler_params=pltpu.CompilerParams(
            dimension_semantics=("parallel",),  # megacore sharding on v7x
        ),
        cost_estimate=pl.CostEstimate(
            flops=flops,
            transcendentals=2 * b_pad * HIDDEN,
            bytes_accessed=bytes_accessed,
        ),
    )(obs_p, w1, b1, w2, b2, w3, b3)

    return out if b_pad == B else out[:B]


def init_policy_params(key, input_dim, output_dim, hidden=HIDDEN):
    """Deterministic init mimicking nn.Linear (uniform +/- 1/sqrt(fan_in)).
    Weights stored as (in, out) so the kernel does x @ W + b."""
    ks = jax.random.split(key, 6)

    def linear(kw, kb, fan_in, fan_out):
        bound = 1.0 / jnp.sqrt(fan_in)
        w = jax.random.uniform(kw, (fan_in, fan_out), jnp.float32, -bound, bound)
        b = jax.random.uniform(kb, (1, fan_out), jnp.float32, -bound, bound)
        return w, b

    w1, b1 = linear(ks[0], ks[1], input_dim, hidden)
    w2, b2 = linear(ks[2], ks[3], hidden, hidden)
    w3, b3 = linear(ks[4], ks[5], hidden, output_dim)
    return {"w1": w1, "b1": b1, "w2": w2, "b2": b2, "w3": w3, "b3": b3}


def policy_forward_ref(obs, params):
    """Pure-JAX reference for correctness checking."""
    h1 = jnp.tanh(obs @ params["w1"] + params["b1"])
    h2 = jnp.tanh(h1 @ params["w2"] + params["b2"])
    return h2 @ params["w3"] + params["b3"]


if __name__ == "__main__":
    key = jax.random.PRNGKey(0)
    k_obs, k_params, k_big = jax.random.split(key, 3)

    batch = 8
    input_dim = 32
    output_dim = 8

    obs = jax.random.normal(k_obs, (batch, input_dim), dtype=jnp.float32)
    params = init_policy_params(k_params, input_dim, output_dim)
    ref = policy_forward_ref(obs, params)

    # f32 path (exact semantics of the PyTorch module).
    p_f32 = prepare_policy_params(params)
    out = jax.block_until_ready(policy_forward(obs, p_f32))
    assert out.shape == (batch, output_dim)
    assert jnp.allclose(out, ref, atol=1e-5, rtol=1e-5), "f32 mismatch vs reference"

    # bf16 MXU operands, f32 bias-add/tanh (v5e-safe bf16 path).
    p_bf16 = prepare_policy_params(params, compute_dtype=jnp.bfloat16)
    out_bf16 = jax.block_until_ready(policy_forward(obs, p_bf16))
    assert jnp.allclose(out_bf16, ref, atol=2e-2, rtol=2e-2), "bf16 mismatch"

    # bf16 operands + bf16 bias-add/tanh (v6e/v7x fast path).
    p_bf16a = prepare_policy_params(params, compute_dtype=jnp.bfloat16,
                                    activation_dtype=jnp.bfloat16)
    out_bf16a = jax.block_until_ready(policy_forward(obs, p_bf16a))
    assert jnp.allclose(out_bf16a, ref, atol=3e-2, rtol=3e-2), "bf16-act mismatch"

    # Multi-tile batch: balanced tiles (2 x 304 for B=600), resident weights,
    # small ragged-tail pad, >=2 grid steps for megacore.
    obs_big = jax.random.normal(k_big, (600, input_dim), dtype=jnp.float32)
    out_big = jax.block_until_ready(policy_forward(obs_big, p_f32))
    ref_big = policy_forward_ref(obs_big, params)
    assert out_big.shape == (600, output_dim)
    assert jnp.allclose(out_big, ref_big, atol=1e-5, rtol=1e-5), "tiled mismatch"

    print("KERNEL_OK")
</pallas_src>

<mosaic_0001>
module attributes {stable_mosaic.version = 11 : i64} {
  func.func @_policy_kernel(%arg0: i32, %arg1: memref<8x32xf32, #tpu.memory_space<vmem>>, %arg2: memref<32x64xf32, #tpu.memory_space<vmem>>, %arg3: memref<1x64xf32, #tpu.memory_space<vmem>>, %arg4: memref<64x64xf32, #tpu.memory_space<vmem>>, %arg5: memref<1x64xf32, #tpu.memory_space<vmem>>, %arg6: memref<64x8xf32, #tpu.memory_space<vmem>>, %arg7: memref<1x8xf32, #tpu.memory_space<vmem>>, %arg8: memref<8x8xf32, #tpu.memory_space<vmem>>) attributes {dimension_semantics = [#tpu.dimension_semantics<parallel>], iteration_bounds = array<i64: 1>, scalar_prefetch = 0 : i64, scratch_operands = 0 : i64, tpu.core_type = #tpu.core_type<tc>, window_params = [{transform_indices = @transform_0, window_bounds = array<i64: 8, 32>}, {pipeline_mode = #tpu.pipeline_mode<synchronous>, transform_indices = @transform_1, window_bounds = array<i64: 32, 64>}, {pipeline_mode = #tpu.pipeline_mode<synchronous>, transform_indices = @transform_2, window_bounds = array<i64: 1, 64>}, {pipeline_mode = #tpu.pipeline_mode<synchronous>, transform_indices = @transform_3, window_bounds = array<i64: 64, 64>}, {pipeline_mode = #tpu.pipeline_mode<synchronous>, transform_indices = @transform_4, window_bounds = array<i64: 1, 64>}, {pipeline_mode = #tpu.pipeline_mode<synchronous>, transform_indices = @transform_5, window_bounds = array<i64: 64, 8>}, {pipeline_mode = #tpu.pipeline_mode<synchronous>, transform_indices = @transform_6, window_bounds = array<i64: 1, 8>}, {transform_indices = @transform_7, window_bounds = array<i64: 8, 8>}]} {
    %c0 = arith.constant 0 : index
    %c0_0 = arith.constant 0 : index
    %0 = vector.load %arg1[%c0, %c0_0] : memref<8x32xf32, #tpu.memory_space<vmem>>, vector<8x32xf32>
    %c0_1 = arith.constant 0 : index
    %c0_2 = arith.constant 0 : index
    %1 = vector.load %arg2[%c0_1, %c0_2] : memref<32x64xf32, #tpu.memory_space<vmem>>, vector<32x64xf32>
    %cst = arith.constant dense<0.000000e+00> : vector<8x64xf32>
    %2 = tpu.matmul %0, %1, %cst {dimension_numbers = #tpu.dot_dimension_numbers<[1], [0], [0], [1], [0, 0, 1, 1], [], []>} : vector<8x32xf32>, vector<32x64xf32>, vector<8x64xf32> -> vector<8x64xf32>
    %c0_3 = arith.constant 0 : index
    %c0_4 = arith.constant 0 : index
    %3 = vector.load %arg3[%c0_3, %c0_4] : memref<1x64xf32, #tpu.memory_space<vmem>>, vector<1x64xf32>
    %4 = vector.broadcast %3 : vector<1x64xf32> to vector<8x64xf32>
    %5 = arith.addf %2, %4 : vector<8x64xf32>
    %6 = math.tanh %5 : vector<8x64xf32>
    %c0_5 = arith.constant 0 : index
    %c0_6 = arith.constant 0 : index
    %7 = vector.load %arg4[%c0_5, %c0_6] : memref<64x64xf32, #tpu.memory_space<vmem>>, vector<64x64xf32>
    %cst_7 = arith.constant dense<0.000000e+00> : vector<8x64xf32>
    %8 = tpu.matmul %6, %7, %cst_7 {dimension_numbers = #tpu.dot_dimension_numbers<[1], [0], [0], [1], [0, 0, 1, 1], [], []>} : vector<8x64xf32>, vector<64x64xf32>, vector<8x64xf32> -> vector<8x64xf32>
    %c0_8 = arith.constant 0 : index
    %c0_9 = arith.constant 0 : index
    %9 = vector.load %arg5[%c0_8, %c0_9] : memref<1x64xf32, #tpu.memory_space<vmem>>, vector<1x64xf32>
    %10 = vector.broadcast %9 : vector<1x64xf32> to vector<8x64xf32>
    %11 = arith.addf %8, %10 : vector<8x64xf32>
    %12 = math.tanh %11 : vector<8x64xf32>
    %c0_10 = arith.constant 0 : index
    %c0_11 = arith.constant 0 : index
    %13 = vector.load %arg6[%c0_10, %c0_11] : memref<64x8xf32, #tpu.memory_space<vmem>>, vector<64x8xf32>
    %cst_12 = arith.constant dense<0.000000e+00> : vector<8x8xf32>
    %14 = tpu.matmul %12, %13, %cst_12 {dimension_numbers = #tpu.dot_dimension_numbers<[1], [0], [0], [1], [0, 0, 1, 1], [], []>} : vector<8x64xf32>, vector<64x8xf32>, vector<8x8xf32> -> vector<8x8xf32>
    %c0_13 = arith.constant 0 : index
    %c0_14 = arith.constant 0 : index
    %15 = vector.load %arg7[%c0_13, %c0_14] : memref<1x8xf32, #tpu.memory_space<vmem>>, vector<1x8xf32>
    %16 = vector.broadcast %15 : vector<1x8xf32> to vector<8x8xf32>
    %17 = arith.addf %14, %16 : vector<8x8xf32>
    %c0_15 = arith.constant 0 : index
    %c0_16 = arith.constant 0 : index
    %18 = vector.load %arg8[%c0_15, %c0_16] : memref<8x8xf32, #tpu.memory_space<vmem>>, vector<8x8xf32>
    tpu.vector_store %arg8[%c0_15, %c0_16], %17 {strides = array<i32>} : memref<8x8xf32, #tpu.memory_space<vmem>>, vector<8x8xf32>,
    return
  }
  func.func @transform_0(%arg0: i32) -> (i32, i32) {
    %c0_i32 = arith.constant 0 : i32
    %c0_i32_0 = arith.constant 0 : i32
    return %arg0, %c0_i32 : i32, i32
  }
  func.func @transform_1(%arg0: i32) -> (i32, i32) {
    %c0_i32 = arith.constant 0 : i32
    %c0_i32_0 = arith.constant 0 : i32
    %c0_i32_1 = arith.constant 0 : i32
    return %c0_i32, %c0_i32_0 : i32, i32
  }
  func.func @transform_2(%arg0: i32) -> (i32, i32) {
    %c0_i32 = arith.constant 0 : i32
    %c0_i32_0 = arith.constant 0 : i32
    %c0_i32_1 = arith.constant 0 : i32
    return %c0_i32, %c0_i32_0 : i32, i32
  }
  func.func @transform_3(%arg0: i32) -> (i32, i32) {
    %c0_i32 = arith.constant 0 : i32
    %c0_i32_0 = arith.constant 0 : i32
    %c0_i32_1 = arith.constant 0 : i32
    return %c0_i32, %c0_i32_0 : i32, i32
  }
  func.func @transform_4(%arg0: i32) -> (i32, i32) {
    %c0_i32 = arith.constant 0 : i32
    %c0_i32_0 = arith.constant 0 : i32
    %c0_i32_1 = arith.constant 0 : i32
    return %c0_i32, %c0_i32_0 : i32, i32
  }
  func.func @transform_5(%arg0: i32) -> (i32, i32) {
    %c0_i32 = arith.constant 0 : i32
    %c0_i32_0 = arith.constant 0 : i32
    %c0_i32_1 = arith.constant 0 : i32
    return %c0_i32, %c0_i32_0 : i32, i32
  }
  func.func @transform_6(%arg0: i32) -> (i32, i32) {
    %c0_i32 = arith.constant 0 : i32
    %c0_i32_0 = arith.constant 0 : i32
    %c0_i32_1 = arith.constant 0 : i32
    return %c0_i32, %c0_i32_0 : i32, i32
  }
  func.func @transform_7(%arg0: i32) -> (i32, i32) {
    %c0_i32 = arith.constant 0 : i32
    %c0_i32_0 = arith.constant 0 : i32
    return %arg0, %c0_i32 : i32, i32
  }
}

</mosaic_0001>

<llo_original>
// kernel: tpu_custom_call.1
$region0: #{tpu_custom_call.1}
  #allocation0 [shape = 'u32[]', space=smem, size = 0x4, offset = 0x4, fixed_abs, tag = 'smem constant byte address 0x4 - core index']
  #allocation1 [shape = 'u32[72,128]{1,0:T(1,128)}', space=vmem, size = 0x9000, scoped, tag = 'internal scratch']
  %s0 = inlined_call_operand.vmem [shape: f32[8,32], index: 0, kind: input, shape index: {}]
  %s1 = inlined_call_operand.hbm [shape: f32[32,64], index: 1, kind: input, shape index: {}]
  %s2 = inlined_call_operand.vmem [shape: f32[1,64], index: 2, kind: input, shape index: {}]
  %s3 = inlined_call_operand.vmem [shape: f32[64,64], index: 3, kind: input, shape index: {}]
  %s4 = inlined_call_operand.vmem [shape: f32[1,64], index: 4, kind: input, shape index: {}]
  %s5 = inlined_call_operand.vmem [shape: f32[64,8], index: 5, kind: input, shape index: {}]
  %s6 = inlined_call_operand.vmem [shape: f32[1,8], index: 6, kind: input, shape index: {}]
  %s7 = inlined_call_operand.hbm [shape: f32[8,8], index: 7, kind: output, shape index: {}]
  %s8 = sld [smem:[#allocation0]]
  $region42: #{tpu_custom_call.1} parent=0
    _
  %s10 = ssub.s32 1, %s8
  %s11 = scalar_select 0, %s10, %s8
  $region1: #{tpu_custom_call.1} parent=0
    #allocation2 [shape = 'u8[16384]{0}', space=vmem, size = 0x4000, scoped, tag = 'input window, operand 1, single buffered']
    #allocation3 [shape = 's32[1]{0}', space=sflag, size = 0x4, scoped, tag = 'scoped memory for tpu_custom_call.1']
    #allocation4 [shape = 's32[1]{0}', space=sflag, size = 0x4, scoped, tag = 'scoped memory for tpu_custom_call.1']
    #allocation5 [shape = 'u8[4096]{0}', space=vmem, size = 0x1000, scoped, tag = 'output window, operand 0, single buffered']
    %12 = vsyncpa [#allocation3], 0
    %13 = vsyncpa [#allocation4], 0
    // Predicated region
    $region2: #{tpu_custom_call.1} parent=1 // pred_check
      _
    $region3: #{tpu_custom_call.1} parent=1 // pred_check_branch
      %15 = sbr.rel (0) target = $region5
    $region4: #{tpu_custom_call.1} parent=1 // pred_region
      _
    $region5: #{tpu_custom_call.1} parent=1 // pred_fallthru
      _
    // Predicated region
    $region6: #{tpu_custom_call.1} parent=1 // pred_check
      _
    $region7: #{tpu_custom_call.1} parent=1 // pred_check_branch
      %17 = sbr.rel (0) target = $region9
    $region8: #{tpu_custom_call.1} parent=1 // pred_region
      %19 = vsyncadd [#allocation3], 0
      %s20 = sshll.u32 %s1, 4
      %s21 = int_to_ptr.hbm [resolvable:$true] %s20
      %s22 = sshll.u32 [#allocation2], 4
      %s23 = int_to_ptr.vmem [resolvable:$true] %s22
      %28 = dma.hbm_to_vmem [thread:$0]  %s21, 512, %s23, [#allocation3], 128, 128, 8
    $region9: #{tpu_custom_call.1} parent=1 // pred_fallthru
      _
    // Predicated region
    $region10: #{tpu_custom_call.1} parent=1 // pred_check
      _
    $region11: #{tpu_custom_call.1} parent=1 // pred_check_branch
      %30 = sbr.rel (0) target = $region13
    $region12: #{tpu_custom_call.1} parent=1 // pred_region
      _
    $region13: #{tpu_custom_call.1} parent=1 // pred_fallthru
      _
    // Predicated region
    $region14: #{tpu_custom_call.1} parent=1 // pred_check
      _
    $region15: #{tpu_custom_call.1} parent=1 // pred_check_branch
      %32 = sbr.rel (0) target = $region17
    $region16: #{tpu_custom_call.1} parent=1 // pred_region
      _
    $region17: #{tpu_custom_call.1} parent=1 // pred_fallthru
      _
    // Predicated region
    $region18: #{tpu_custom_call.1} parent=1 // pred_check
      _
    $region19: #{tpu_custom_call.1} parent=1 // pred_check_branch
      %34 = sbr.rel (0) target = $region21
    $region20: #{tpu_custom_call.1} parent=1 // pred_region
      _
    $region21: #{tpu_custom_call.1} parent=1 // pred_fallthru
      _
    // Predicated region
    $region22: #{tpu_custom_call.1} parent=1 // pred_check
      _
    $region23: #{tpu_custom_call.1} parent=1 // pred_check_branch
      %36 = sbr.rel (0) target = $region25
    $region24: #{tpu_custom_call.1} parent=1 // pred_region
      _
    $region25: #{tpu_custom_call.1} parent=1 // pred_fallthru
      _
    // Predicated region
    $region26: #{tpu_custom_call.1} parent=1 // pred_check
      _
    $region27: #{tpu_custom_call.1} parent=1 // pred_check_branch
      %38 = sbr.rel (0) target = $region29
    $region28: #{tpu_custom_call.1} parent=1 // pred_region
      _
    $region29: #{tpu_custom_call.1} parent=1 // pred_fallthru
      _
    // Predicated region
    $region30: #{tpu_custom_call.1} parent=1 // pred_check
      _
    $region31: #{tpu_custom_call.1} parent=1 // pred_check_branch
      %40 = sbr.rel (0) target = $region33
    $region32: #{tpu_custom_call.1} parent=1 // pred_region
      %42 = dma.done [#allocation3], 512
    $region33: #{tpu_custom_call.1} parent=1 // pred_fallthru
      _
    %v43 = vld [vmem:[%s0] sm:$0xff]
    %v44 = vld [vmem:[#allocation2] sm:$0xff]
    %v45 = vld [vmem:[#allocation2 + $0x8] sm:$0xff]
    %v46 = vld [vmem:[#allocation2 + $0x10] sm:$0xff]
    %v47 = vld [vmem:[#allocation2 + $0x18] sm:$0xff]
    %v48 = vld [vmem:[%s2] sm:$0x1]
    %v50 = vperm.slane %v48, 0
    %vm52 = vcmask 261120
    %v54 = vsel %vm52, %v43, 0
    %56 = vmatpush.msra.mxu0 0.0
    %57 = vmatpush.msra.mxu0 0.0
    %58 = vmatpush.msra.mxu0 0.0
    %59 = vmatpush.msra.mxu0 0.0
    %60 = vmatpush.msra.mxu0 0.0
    %61 = vmatpush.msra.mxu0 0.0
    %62 = vmatpush.msra.mxu0 0.0
    %63 = vmatpush.msra.mxu0 0.0
    %64 = vmatpush.msra.mxu0 0.0
    %65 = vmatpush.msra.mxu0 0.0
    %66 = vmatpush.msra.mxu0 0.0
    %67 = vmatpush.msra.mxu0 0.0
    %68 = vmatpush.msra.mxu0 %v47
    %69 = vmatpush.msra.mxu0 %v46
    %70 = vmatpush.msra.mxu0 %v45
    %71 = vmatpush.msra.mxu0 %v44
    %72 = vmatmul.f32.gmra.mxu0 %v54
    %v73 = vpop.f32.mrf.mxu0
    %v74 = vadd.f32 %v50, %v73
    %75 = vdwg.mxu0
    %v76 = vtanh.pop %v74
    %v77 = vld [vmem:[%s3] sm:$0xff]
    %v78 = vld [vmem:[%s3 + $0x8] sm:$0xff]
    %v79 = vld [vmem:[%s3 + $0x10] sm:$0xff]
    %v80 = vld [vmem:[%s3 + $0x18] sm:$0xff]
    %v81 = vld [vmem:[%s3 + $0x20] sm:$0xff]
    %v82 = vld [vmem:[%s3 + $0x28] sm:$0xff]
    %v83 = vld [vmem:[%s3 + $0x30] sm:$0xff]
    %v84 = vld [vmem:[%s3 + $0x38] sm:$0xff]
    %v85 = vld [vmem:[%s4] sm:$0x1]
    %v87 = vperm.slane %v85, 0
    %vm89 = vcmask 523264
    %v91 = vsel %vm89, %v76, 0
    %93 = vmatpush.msra.mxu0 0.0
    %94 = vmatpush.msra.mxu0 0.0
    %95 = vmatpush.msra.mxu0 0.0
    %96 = vmatpush.msra.mxu0 0.0
    %97 = vmatpush.msra.mxu0 0.0
    %98 = vmatpush.msra.mxu0 0.0
    %99 = vmatpush.msra.mxu0 0.0
    %100 = vmatpush.msra.mxu0 0.0
    %101 = vmatpush.msra.mxu0 %v84
    %102 = vmatpush.msra.mxu0 %v83
    %103 = vmatpush.msra.mxu0 %v82
    %104 = vmatpush.msra.mxu0 %v81
    %105 = vmatpush.msra.mxu0 %v80
    %106 = vmatpush.msra.mxu0 %v79
    %107 = vmatpush.msra.mxu0 %v78
    %108 = vmatpush.msra.mxu0 %v77
    %109 = vmatmul.f32.gmra.mxu0 %v91
    %v110 = vpop.f32.mrf.mxu0
    %v111 = vadd.f32 %v87, %v110
    %112 = vdwg.mxu0
    %v113 = vtanh.pop %v111
    %v114 = vld [vmem:[%s5] sm:$0xff]
    %v115 = vld [vmem:[%s5 + $0x8] sm:$0xff]
    %v116 = vld [vmem:[%s5 + $0x10] sm:$0xff]
    %v117 = vld [vmem:[%s5 + $0x18] sm:$0xff]
    %v118 = vld [vmem:[%s5 + $0x20] sm:$0xff]
    %v119 = vld [vmem:[%s5 + $0x28] sm:$0xff]
    %v120 = vld [vmem:[%s5 + $0x30] sm:$0xff]
    %v121 = vld [vmem:[%s5 + $0x38] sm:$0xff]
    %v122 = vld [vmem:[%s6] sm:$0x1]
    %v124 = vperm.slane %v122, 0
    %v127 = vsel %vm89, %v113, 0
    %129 = vmatpush.msra.mxu0 0.0
    %130 = vmatpush.msra.mxu0 0.0
    %131 = vmatpush.msra.mxu0 0.0
    %132 = vmatpush.msra.mxu0 0.0
    %133 = vmatpush.msra.mxu0 0.0
    %134 = vmatpush.msra.mxu0 0.0
    %135 = vmatpush.msra.mxu0 0.0
    %136 = vmatpush.msra.mxu0 0.0
    %137 = vmatpush.msra.mxu0 %v121
    %138 = vmatpush.msra.mxu0 %v120
    %139 = vmatpush.msra.mxu0 %v119
    %140 = vmatpush.msra.mxu0 %v118
    %141 = vmatpush.msra.mxu0 %v117
    %142 = vmatpush.msra.mxu0 %v116
    %143 = vmatpush.msra.mxu0 %v115
    %144 = vmatpush.msra.mxu0 %v114
    %145 = vmatmul.f32.gmra.mxu0 %v127
    %v146 = vpop.f32.mrf.mxu0
    %v147 = vadd.f32 %v124, %v146
    %148 = vdwg.mxu0
    %vm149 = vcmask 64512
    %150 = vst.msk [vmem:[#allocation5] sm:$0xff] %vm149, %v147
    // Predicated region
    $region34: #{tpu_custom_call.1} parent=1 // pred_check
      _
    $region35: #{tpu_custom_call.1} parent=1 // pred_check_branch
      %152 = sbr.rel (0) target = $region37
    $region36: #{tpu_custom_call.1} parent=1 // pred_region
      %154 = vsyncadd [#allocation4], 0
      %s156 = sshll.u32 [#allocation5], 4
      %s157 = int_to_ptr.vmem [resolvable:$true] %s156
      %s158 = sshll.u32 %s7, 4
      %s159 = int_to_ptr.hbm [resolvable:$true] %s158
      %161 = dma.vmem_to_hbm [thread:$0]  %s157, 128, %s159, [#allocation4]
    $region37: #{tpu_custom_call.1} parent=1 // pred_fallthru
      _
    // Predicated region
    $region38: #{tpu_custom_call.1} parent=1 // pred_check
      _
    $region39: #{tpu_custom_call.1} parent=1 // pred_check_branch
      %163 = sbr.rel (0) target = $region41
    $region40: #{tpu_custom_call.1} parent=1 // pred_region
      %165 = dma.done [#allocation4], 128
    $region41: #{tpu_custom_call.1} parent=1 // pred_fallthru
      _
    %166 = vsyncpa [#allocation3], 1
    %167 = vsyncpa [#allocation4], 1

</llo_original>
